<compile_context>
chip_gen: v5e
topology: v5e:2x2
jax: 0.10.0
libtpu: 0.0.40
codegen_flags: <defaults>
</compile_context>

<pallas_src>
import functools
import math

import jax
import jax.numpy as jnp
from jax.experimental import pallas as pl
from jax.experimental.pallas import tpu as pltpu


def _round_up(x, m):
    return (x + m - 1) // m * m


_GATHER_SEMS = 32               # DMA-completion sems; several row copies share one
_DEFAULT_VMEM_CAP = 64 << 20    # conservative fallback: v7x per-TensorCore VMEM


def _vmem_capacity_bytes():
    try:
        return int(pltpu.get_tpu_info().vmem_capacity_bytes)
    except Exception:
        return _DEFAULT_VMEM_CAP


def _is_v5():
    try:
        return "v5" in jax.devices()[0].device_kind.lower()
    except Exception:
        return False


def _embed_onehot_kernel(ids_ref, table_ref, o_ref, *, scale):
    # ids_ref:   (TB, 1)    int32 token ids for this block
    # table_ref: (V, Dp)    embedding table, VMEM-resident across grid steps
    # o_ref:     (TB, Dp)   output block
    tb = o_ref.shape[0]
    v = table_ref.shape[0]
    cols = jax.lax.broadcasted_iota(jnp.int32, (tb, v), 1)
    one_hot = (ids_ref[...] == cols).astype(table_ref.dtype)       # (TB, V)
    rows = jnp.dot(one_hot, table_ref[...],
                   preferred_element_type=jnp.float32)             # (TB, Dp)
    o_ref[...] = (rows * scale).astype(o_ref.dtype)


def _embed_gather_kernel(ids_ref, table_hbm, o_ref, row_buf, sems,
                         *, scale, tb, nsems):
    # ids_ref:   (n_pad,)   int32 flat token ids (scalar-prefetched, SMEM)
    # table_hbm: (V, Dp)    raw HBM ref (memory_space=pl.ANY), pre-padded rows
    # o_ref:     (TB, Dp)   output block (VMEM, auto-pipelined)
    # row_buf:   (TB, Dp)   VMEM scratch the gathered rows land in
    # sems:      (nsems,)   DMA semaphores shared round-robin by the row copies
    base = pl.program_id(0) * tb

    def row_copy(src_row, t):
        # src/dst are always (1, Dp) so the .wait() descriptor (built with a
        # proxy row 0) has exactly the same byte count as the .start().
        return pltpu.make_async_copy(
            table_hbm.at[pl.ds(src_row, 1), :],
            row_buf.at[pl.ds(t, 1), :],
            sems.at[t % nsems],
        )

    # Issue every row fetch of this block up front: ~TB rows in flight
    # (TB * Dp * itemsize bytes) so the gather is BW-bound, not latency-bound.
    # The SMEM id read happens strictly before any .wait().
    def issue(t, carry):
        tok = ids_ref[base + t]
        row_copy(tok, t).start()
        return carry
    jax.lax.fori_loop(0, tb, issue, 0, unroll=8)

    # Single wait pass.  Copies sharing a semaphore have identical sizes, so
    # after all tb waits every row is guaranteed to have landed.
    def drain(t, carry):
        row_copy(0, t).wait()
        return carry
    jax.lax.fori_loop(0, tb, drain, 0)

    o_ref[...] = (row_buf[...].astype(jnp.float32) * scale).astype(o_ref.dtype)


def embeddings_forward(ids, table, *, block_tokens=None, force_hbm_gather=False):
    """Pallas equivalent of Embeddings.forward: lut(ids) * sqrt(d_model)."""
    B, S = ids.shape
    V, D = table.shape
    scale = float(math.sqrt(D))
    out_dtype = table.dtype
    itemsize = jnp.dtype(table.dtype).itemsize

    vmem_cap = _vmem_capacity_bytes()
    v5 = _is_v5()

    n = B * S
    # Clamp untrusted ids so they can never drive an OOB HBM read.
    flat_ids = jnp.clip(ids.reshape(-1).astype(jnp.int32), 0, V - 1)

    # Token block: multiple of 8 sublanes.  256 fills the 256-wide MXU M dim
    # on v6e/v7x and halves per-step overhead; v5e's 128-wide MXU is full at 128.
    if block_tokens is None:
        block_tokens = 128 if v5 else 256
    tb = min(_round_up(block_tokens, 8), _round_up(n, 8))

    # Pre-pad the table so every output store / row DMA is lane-dense.  Under
    # jit this pad is hoisted/fused; callers with a fixed table should pad once
    # at init and pass the padded weight directly.
    d_pad = _round_up(D, 128)
    table_p = table if d_pad == D else jnp.pad(table, ((0, 0), (0, d_pad - D)))

    # One-hot MXU gather costs 2*V flops per output element; keep the resident
    # path at/below the HBM roofline (crossover is lower on v5e's weaker MXU).
    onehot_cap = 512 if v5 else 1024

    def resident_vmem_need(tb_):
        return (2 * V * d_pad * itemsize            # table (BlockSpec double-buffers)
                + 2 * tb_ * d_pad * itemsize        # output blocks
                + 2 * tb_ * 128 * 4                 # (tb,1) id blocks pad to 128 lanes
                + 2 * tb_ * _round_up(V, 128) * 4   # one-hot + compare temporaries
                + tb_ * d_pad * 4)                  # f32 matmul accumulator

    use_resident = (not force_hbm_gather
                    and V <= onehot_cap
                    and resident_vmem_need(tb) <= int(0.7 * vmem_cap))

    if not use_resident:
        # Shrink the token block if a (tb, d_pad) gather tile would blow VMEM.
        while tb > 8 and 3 * tb * d_pad * itemsize > int(0.6 * vmem_cap):
            tb = max(8, _round_up(tb // 2, 8))

    n_pad = _round_up(n, tb)
    if n_pad > n:
        flat_ids = jnp.pad(flat_ids, (0, n_pad - n))
    grid = (n_pad // tb,)

    def vmem_limit_for(need):
        if need <= (16 << 20):
            return None           # fits the conservative scoped default everywhere
        # Never request more than the physical per-core VMEM of this generation.
        return min(int(1.5 * need), int(0.8 * vmem_cap))

    if use_resident:
        # ---- table-resident, one-hot MXU gather ---------------------------
        ids2d = flat_ids.reshape(n_pad, 1)
        need = resident_vmem_need(tb)
        cost = pl.CostEstimate(
            flops=2 * n_pad * V * d_pad,
            transcendentals=0,
            bytes_accessed=V * d_pad * itemsize + n_pad * 4 + n_pad * d_pad * itemsize,
        )
        out_flat = pl.pallas_call(
            functools.partial(_embed_onehot_kernel, scale=scale),
            out_shape=jax.ShapeDtypeStruct((n_pad, d_pad), out_dtype),
            grid=grid,
            in_specs=[
                pl.BlockSpec((tb, 1), lambda i: (i, 0)),      # token-id block
                pl.BlockSpec((V, d_pad), lambda i: (0, 0)),   # constant map: 1 HBM fetch
            ],
            out_specs=pl.BlockSpec((tb, d_pad), lambda i: (i, 0)),
            compiler_params=pltpu.CompilerParams(
                dimension_semantics=("parallel",),
                vmem_limit_bytes=vmem_limit_for(need),
            ),
            cost_estimate=cost,
        )(ids2d, table_p)
    else:
        # ---- HBM table, deep row-gather DMA pipeline ----------------------
        nsems = min(_GATHER_SEMS, tb)
        need = 3 * tb * d_pad * itemsize + (1 << 20)
        cost = pl.CostEstimate(
            flops=0,
            transcendentals=0,
            bytes_accessed=2 * n_pad * d_pad * itemsize + n_pad * 4,
        )
        out_flat = pl.pallas_call(
            functools.partial(_embed_gather_kernel, scale=scale, tb=tb, nsems=nsems),
            out_shape=jax.ShapeDtypeStruct((n_pad, d_pad), out_dtype),
            grid_spec=pltpu.PrefetchScalarGridSpec(
                num_scalar_prefetch=1,
                grid=grid,
                in_specs=[pl.BlockSpec(memory_space=pl.ANY)],   # table stays in HBM
                out_specs=pl.BlockSpec((tb, d_pad), lambda i, ids: (i, 0)),
                scratch_shapes=[
                    pltpu.VMEM((tb, d_pad), table.dtype),
                    pltpu.SemaphoreType.DMA((nsems,)),
                ],
            ),
            compiler_params=pltpu.CompilerParams(
                dimension_semantics=("parallel",),
                vmem_limit_bytes=vmem_limit_for(need),
            ),
            cost_estimate=cost,
        )(flat_ids, table_p)

    if n_pad > n:
        out_flat = out_flat[:n]
    if d_pad > D:
        out_flat = out_flat[:, :D]
    return out_flat.reshape(B, S, D)


if __name__ == "__main__":
    vocab_size = 32
    d_model = 32
    batch, seq = 2, 8

    key = jax.random.PRNGKey(0)
    k_tbl, k_ids, k_tbl2, k_ids2 = jax.random.split(key, 4)

    # nn.Embedding default init: weight ~ N(0, 1)
    table = jax.random.normal(k_tbl, (vocab_size, d_model), dtype=jnp.float32)
    ids = jax.random.randint(k_ids, (batch, seq), 0, vocab_size, dtype=jnp.int32)

    ref = jnp.take(table, ids, axis=0) * math.sqrt(d_model)

    # 1) Table-resident (one-hot MXU) path -- default for small vocabularies.
    out = jax.block_until_ready(embeddings_forward(ids, table))
    assert out.shape == (batch, seq, d_model)
    assert out.dtype == table.dtype
    if not jnp.allclose(out, ref, atol=1e-5, rtol=1e-5):
        raise AssertionError("resident-table Pallas embedding mismatch vs reference")

    # 2) HBM-gather path (what large vocab tables use), forced here at small
    #    shapes so both paths are verified on-device.  Also exercises the
    #    lane-padded (d_pad=128) output path since d_model=32.
    out_g = jax.block_until_ready(
        embeddings_forward(ids, table, force_hbm_gather=True))
    if not jnp.allclose(out_g, ref, atol=1e-5, rtol=1e-5):
        raise AssertionError("HBM-gather Pallas embedding mismatch vs reference")

    # 3) Non-aligned shapes: d_model not a multiple of 128 and token count not
    #    a multiple of the block -> exercises padding + multi-step grid.
    v2, d2, b2, s2 = 50, 48, 2, 20
    table2 = jax.random.normal(k_tbl2, (v2, d2), dtype=jnp.float32)
    ids2 = jax.random.randint(k_ids2, (b2, s2), 0, v2, dtype=jnp.int32)
    ref2 = jnp.take(table2, ids2, axis=0) * math.sqrt(d2)
    out2 = jax.block_until_ready(
        embeddings_forward(ids2, table2, block_tokens=16))
    if not jnp.allclose(out2, ref2, atol=1e-5, rtol=1e-5):
        raise AssertionError("padded/multi-block Pallas embedding mismatch")

    print("KERNEL_OK")
</pallas_src>

<mosaic_0001>
module attributes {stable_mosaic.version = 11 : i64} {
  func.func @_embed_onehot_kernel(%arg0: i32, %arg1: memref<16x1xi32, #tpu.memory_space<vmem>>, %arg2: memref<32x128xf32, #tpu.memory_space<vmem>>, %arg3: memref<16x128xf32, #tpu.memory_space<vmem>>) attributes {dimension_semantics = [#tpu.dimension_semantics<parallel>], iteration_bounds = array<i64: 1>, scalar_prefetch = 0 : i64, scratch_operands = 0 : i64, tpu.core_type = #tpu.core_type<tc>, window_params = [{transform_indices = @transform_0, window_bounds = array<i64: 16, 1>}, {pipeline_mode = #tpu.pipeline_mode<synchronous>, transform_indices = @transform_1, window_bounds = array<i64: 32, 128>}, {transform_indices = @transform_2, window_bounds = array<i64: 16, 128>}]} {
    %0 = tpu.iota {dimensions = array<i32: 1>} : vector<16x32xi32>
    %c0 = arith.constant 0 : index
    %c0_0 = arith.constant 0 : index
    %1 = vector.load %arg1[%c0, %c0_0] : memref<16x1xi32, #tpu.memory_space<vmem>>, vector<16x1xi32>
    %2 = vector.broadcast %1 : vector<16x1xi32> to vector<16x32xi32>
    %3 = arith.cmpi eq, %2, %0 : vector<16x32xi32>
    %4 = arith.extui %3 : vector<16x32xi1> to vector<16x32xi32>
    %5 = arith.sitofp %4 : vector<16x32xi32> to vector<16x32xf32>
    %c0_1 = arith.constant 0 : index
    %c0_2 = arith.constant 0 : index
    %6 = vector.load %arg2[%c0_1, %c0_2] : memref<32x128xf32, #tpu.memory_space<vmem>>, vector<32x128xf32>
    %cst = arith.constant dense<0.000000e+00> : vector<16x128xf32>
    %7 = tpu.matmul %5, %6, %cst {dimension_numbers = #tpu.dot_dimension_numbers<[1], [0], [0], [1], [0, 0, 1, 1], [], []>} : vector<16x32xf32>, vector<32x128xf32>, vector<16x128xf32> -> vector<16x128xf32>
    %cst_3 = arith.constant 5.65685415 : f32
    %8 = vector.broadcast %cst_3 : f32 to vector<16x128xf32>
    %9 = arith.mulf %7, %8 : vector<16x128xf32>
    %c0_4 = arith.constant 0 : index
    %c0_5 = arith.constant 0 : index
    %10 = vector.load %arg3[%c0_4, %c0_5] : memref<16x128xf32, #tpu.memory_space<vmem>>, vector<16x128xf32>
    tpu.vector_store %arg3[%c0_4, %c0_5], %9 {strides = array<i32>} : memref<16x128xf32, #tpu.memory_space<vmem>>, vector<16x128xf32>,
    return
  }
  func.func @transform_0(%arg0: i32) -> (i32, i32) {
    %c0_i32 = arith.constant 0 : i32
    %c0_i32_0 = arith.constant 0 : i32
    return %arg0, %c0_i32 : i32, i32
  }
  func.func @transform_1(%arg0: i32) -> (i32, i32) {
    %c0_i32 = arith.constant 0 : i32
    %c0_i32_0 = arith.constant 0 : i32
    %c0_i32_1 = arith.constant 0 : i32
    return %c0_i32, %c0_i32_0 : i32, i32
  }
  func.func @transform_2(%arg0: i32) -> (i32, i32) {
    %c0_i32 = arith.constant 0 : i32
    %c0_i32_0 = arith.constant 0 : i32
    return %arg0, %c0_i32 : i32, i32
  }
}

</mosaic_0001>

<llo_original>
// kernel: tpu_custom_call.1
$region0: #{tpu_custom_call.1}
  #allocation0 [shape = 'u32[]', space=smem, size = 0x4, offset = 0x4, fixed_abs, tag = 'smem constant byte address 0x4 - core index']
  #allocation1 [shape = 'u32[72,128]{1,0:T(1,128)}', space=vmem, size = 0x9000, scoped, tag = 'internal scratch']
  %s0 = inlined_call_operand.vmem [shape: s32[16,1], index: 0, kind: input, shape index: {}]
  %s1 = inlined_call_operand.hbm [shape: f32[32,128], index: 1, kind: input, shape index: {}]
  %s2 = inlined_call_operand.hbm [shape: f32[16,128], index: 2, kind: output, shape index: {}]
  %s3 = sld [smem:[#allocation0]]
  $region22: #{tpu_custom_call.1} parent=0
    _
  %s5 = ssub.s32 1, %s3
  %s6 = scalar_select 0, %s5, %s3
  $region1: #{tpu_custom_call.1} parent=0
    #allocation2 [shape = 'u8[16384]{0}', space=vmem, size = 0x4000, scoped, tag = 'input window, operand 1, single buffered']
    #allocation3 [shape = 's32[1]{0}', space=sflag, size = 0x4, scoped, tag = 'scoped memory for tpu_custom_call.1']
    #allocation4 [shape = 's32[1]{0}', space=sflag, size = 0x4, scoped, tag = 'scoped memory for tpu_custom_call.1']
    #allocation5 [shape = 'u8[8192]{0}', space=vmem, size = 0x2000, scoped, tag = 'output window, operand 0, single buffered']
    %7 = vsyncpa [#allocation3], 0
    %8 = vsyncpa [#allocation4], 0
    // Predicated region
    $region2: #{tpu_custom_call.1} parent=1 // pred_check
      _
    $region3: #{tpu_custom_call.1} parent=1 // pred_check_branch
      %10 = sbr.rel (0) target = $region5
    $region4: #{tpu_custom_call.1} parent=1 // pred_region
      _
    $region5: #{tpu_custom_call.1} parent=1 // pred_fallthru
      _
    // Predicated region
    $region6: #{tpu_custom_call.1} parent=1 // pred_check
      _
    $region7: #{tpu_custom_call.1} parent=1 // pred_check_branch
      %12 = sbr.rel (0) target = $region9
    $region8: #{tpu_custom_call.1} parent=1 // pred_region
      %14 = vsyncadd [#allocation3], 0
      %s15 = sshll.u32 %s1, 4
      %s16 = int_to_ptr.hbm [resolvable:$true] %s15
      %s17 = sshll.u32 [#allocation2], 4
      %s18 = int_to_ptr.vmem [resolvable:$true] %s17
      %23 = dma.hbm_to_vmem [thread:$0]  %s16, 512, %s18, [#allocation3], 128, 128, 8
    $region9: #{tpu_custom_call.1} parent=1 // pred_fallthru
      _
    // Predicated region
    $region10: #{tpu_custom_call.1} parent=1 // pred_check
      _
    $region11: #{tpu_custom_call.1} parent=1 // pred_check_branch
      %25 = sbr.rel (0) target = $region13
    $region12: #{tpu_custom_call.1} parent=1 // pred_region
      %27 = dma.done [#allocation3], 512
    $region13: #{tpu_custom_call.1} parent=1 // pred_fallthru
      _
    %v28 = vlaneseq
    %v29 = vand.u32 %v28, 127
    %v30 = vld [vmem:[%s0] sm:$0xff]
    %v31 = vld [vmem:[%s0 + $0x8] sm:$0xff]
    %32 = vset.pattern.permute.xlu0 0
    %33 = vperm.xlu0 %32, %v30
    %v34 = vpop.permute.xlu0 %33
    %35 = vset.pattern.permute.xlu0 0
    %36 = vperm.xlu0 %35, %v31
    %v37 = vpop.permute.xlu0 %36
    %vm38 = vcmp.eq.s32.totalorder %v34, %v29
    %vm39 = vcmp.eq.s32.totalorder %v37, %v29
    %v40 = vsel %vm38, 1, 0
    %v41 = vsel %vm39, 1, 0
    %v42 = vcvt.s32.f32 %v40
    %v43 = vcvt.s32.f32 %v41
    %v44 = vld [vmem:[#allocation2] sm:$0xff]
    %v45 = vld [vmem:[#allocation2 + $0x8] sm:$0xff]
    %v46 = vld [vmem:[#allocation2 + $0x10] sm:$0xff]
    %v47 = vld [vmem:[#allocation2 + $0x18] sm:$0xff]
    %vm48 = vcmask 261120
    %v50 = vsel %vm48, %v42, 0
    %v53 = vsel %vm48, %v43, 0
    %55 = vmatpush.msra.mxu0 0.0
    %56 = vmatpush.msra.mxu0 0.0
    %57 = vmatpush.msra.mxu0 0.0
    %58 = vmatpush.msra.mxu0 0.0
    %59 = vmatpush.msra.mxu0 0.0
    %60 = vmatpush.msra.mxu0 0.0
    %61 = vmatpush.msra.mxu0 0.0
    %62 = vmatpush.msra.mxu0 0.0
    %63 = vmatpush.msra.mxu0 0.0
    %64 = vmatpush.msra.mxu0 0.0
    %65 = vmatpush.msra.mxu0 0.0
    %66 = vmatpush.msra.mxu0 0.0
    %67 = vmatpush.msra.mxu0 %v47
    %68 = vmatpush.msra.mxu0 %v46
    %69 = vmatpush.msra.mxu0 %v45
    %70 = vmatpush.msra.mxu0 %v44
    %71 = vmatmul.f32.gmra.mxu0 %v50
    %v72 = vpop.f32.mrf.mxu0
    %v73 = vadd.f32 0.0, %v72
    %74 = vmatmul.f32.gmra.mxu0 %v53
    %v75 = vpop.f32.mrf.mxu0
    %v76 = vadd.f32 0.0, %v75
    %77 = vdwg.mxu0
    %v78 = vmul.f32 %v73, 5.656854
    %v79 = vmul.f32 %v76, 5.656854
    %80 = vst [vmem:[#allocation5] sm:$0xff] %v78
    %81 = vst [vmem:[#allocation5 + $0x8] sm:$0xff] %v79
    // Predicated region
    $region14: #{tpu_custom_call.1} parent=1 // pred_check
      _
    $region15: #{tpu_custom_call.1} parent=1 // pred_check_branch
      %83 = sbr.rel (0) target = $region17
    $region16: #{tpu_custom_call.1} parent=1 // pred_region
      %85 = vsyncadd [#allocation4], 0
      %s86 = sshll.u32 [#allocation5], 4
      %s87 = int_to_ptr.vmem [resolvable:$true] %s86
      %s88 = sshll.u32 %s2, 4
      %s89 = int_to_ptr.hbm [resolvable:$true] %s88
      %94 = dma.vmem_to_hbm [thread:$0]  %s87, 256, %s89, [#allocation4], 128, 128, 8
    $region17: #{tpu_custom_call.1} parent=1 // pred_fallthru
      _
    // Predicated region
    $region18: #{tpu_custom_call.1} parent=1 // pred_check
      _
    $region19: #{tpu_custom_call.1} parent=1 // pred_check_branch
      %96 = sbr.rel (0) target = $region21
    $region20: #{tpu_custom_call.1} parent=1 // pred_region
      %98 = dma.done [#allocation4], 256
    $region21: #{tpu_custom_call.1} parent=1 // pred_fallthru
      _
    %99 = vsyncpa [#allocation3], 1
    %100 = vsyncpa [#allocation4], 1

</llo_original>
